<compile_context>
chip_gen: v7x
topology: tpu7x:2x2x1
jax: 0.10.0
libtpu: 0.0.40
codegen_flags: <defaults>
</compile_context>

<pallas_src>
import jax
import jax.numpy as jnp
from jax.experimental import pallas as pl
from jax.experimental.pallas import tpu as pltpu

LANE = 128                                 # class tiles are multiples of 128 lanes
SUBLANE = 8                                # cls output blocks are sublane-aligned
WEIGHT_TILE_VMEM_BUDGET = 16 * 1024 * 1024 # 2 in-flight weight tiles <= this
VMEM_LIMIT_CAP = 48 * 1024 * 1024          # v7x-safe (64 MiB physical per TC)


def _round_up(x, m):
    return (x + m - 1) // m * m


# ---------------------------------------------------------------------------
# Stage 1: BatchNorm (training-mode batch stats) + l2-normalized features.
# ---------------------------------------------------------------------------
def bn_l2_kernel(x_ref, gamma_ref, beta_ref, bn_ref, feat_ref):
    x = x_ref[...]                                               # (B, C) f32
    mean = jnp.mean(x, axis=0, keepdims=True)                    # (1, C)
    centered = x - mean
    var = jnp.mean(centered * centered, axis=0, keepdims=True)   # biased batch var
    inv_std = jax.lax.rsqrt(var + 1e-5)
    bn = centered * inv_std * gamma_ref[...] + beta_ref[...]
    bn_ref[...] = bn.astype(bn_ref.dtype)       # cast to matmul dtype once, here
    # Normalize(power=2) on the ORIGINAL features (no eps, matches the module).
    sq_sum = jnp.sum(x * x, axis=1, keepdims=True)               # (B, 1)
    feat_ref[...] = x * jax.lax.rsqrt(sq_sum)


# ---------------------------------------------------------------------------
# Stage 2: cls_score tile = bn @ W_t[:, tile].  Pure MXU work per grid step.
# ---------------------------------------------------------------------------
def cls_matmul_kernel(bn_ref, w_ref, cls_ref):
    cls_ref[...] = jax.lax.dot_general(
        bn_ref[...], w_ref[...],
        dimension_numbers=(((1,), (0,)), ((), ())),   # (B,C) x (C,TN) -> (B,TN)
        preferred_element_type=jnp.float32,
    )


def prepare_classifier_weight(weight, *, dtype=jnp.bfloat16):
    """One-time (init-time) weight prep: pick TN, pad P, transpose to (C, Pp), cast.

    Done once per parameter set, never per forward call.
    """
    P, C = weight.shape
    itemsize = jnp.dtype(dtype).itemsize
    # Largest lane-multiple tile s.t. 2 double-buffered weight tiles fit the budget
    # (dtype-aware: bf16 -> 4096, f32 -> 2048 at C=1024).
    max_tn = max(LANE, (WEIGHT_TILE_VMEM_BUDGET // (2 * C * itemsize)) // LANE * LANE)
    TN = min(max_tn, _round_up(P, LANE))
    Pp = _round_up(P, TN)
    w = weight
    if Pp != P:
        w = jnp.pad(w, ((0, Pp - P), (0, 0)))
    w_t = jnp.asarray(w.T, dtype=dtype)        # (C, Pp): canonical MXU RHS layout,
    return {                                   # no per-tile transpose in the kernel
        "w_t": w_t, "tn": TN, "p": P, "pp": Pp, "c": C, "dtype": dtype,
    }


def classifier2_forward(features, gamma, beta, prepared):
    """features: (B, 1024) f32.  Returns (cls_score (B, P) f32, l2_features (B, 1024) f32)."""
    B, C = features.shape
    assert C == prepared["c"], "feature width mismatch with prepared weight"
    TN, P, Pp = prepared["tn"], prepared["p"], prepared["pp"]
    w_t = prepared["w_t"]
    w_dtype = prepared["dtype"]
    itemsize = jnp.dtype(w_dtype).itemsize

    gamma2 = gamma.reshape(1, C).astype(jnp.float32)
    beta2 = beta.reshape(1, C).astype(jnp.float32)

    # ---- stage 1: BN + l2 (single step, everything resident in VMEM) -------
    bn, feat_norm = pl.pallas_call(
        bn_l2_kernel,
        out_shape=(
            jax.ShapeDtypeStruct((B, C), w_dtype),     # BN(features), matmul dtype
            jax.ShapeDtypeStruct((B, C), jnp.float32), # l2-normalized features
        ),
    )(features, gamma2, beta2)

    # ---- stage 2: class-tiled matmul ----------------------------------------
    Bp = _round_up(B, SUBLANE)        # sublane-aligned rows for the tiled cls output
    if Bp != B:
        bn = jnp.pad(bn, ((0, Bp - B), (0, 0)))
    n_tiles = Pp // TN

    # VMEM actually needed: 2x weight tiles + 2x cls tiles + (2x) resident bn.
    vmem_need = 2 * C * TN * itemsize + 2 * Bp * TN * 4 + 2 * Bp * C * itemsize
    vmem_limit = min(VMEM_LIMIT_CAP, _round_up(vmem_need + (4 << 20), 1 << 20))

    cost = pl.CostEstimate(
        flops=2 * Bp * C * Pp,
        transcendentals=0,
        bytes_accessed=itemsize * (Bp * C + C * Pp) + 4 * Bp * Pp,
    )

    grid_spec = pltpu.PrefetchScalarGridSpec(
        num_scalar_prefetch=0,
        grid=(n_tiles,),
        in_specs=[
            pl.BlockSpec((Bp, C), lambda j: (0, 0)),   # bn activations: resident
            pl.BlockSpec((C, TN), lambda j: (0, j)),   # weight tiles: streamed, 2-buffered
        ],
        out_specs=pl.BlockSpec((Bp, TN), lambda j: (0, j)),  # lane-dense stores
    )

    cls_pad = pl.pallas_call(
        cls_matmul_kernel,
        out_shape=jax.ShapeDtypeStruct((Bp, Pp), jnp.float32),
        grid_spec=grid_spec,
        compiler_params=pltpu.CompilerParams(
            # Class tiles are fully independent -> shardable across v7x's two TCs.
            dimension_semantics=("parallel",),
            vmem_limit_bytes=vmem_limit,
        ),
        cost_estimate=cost,
    )(bn, w_t)

    return cls_pad[:B, :P], feat_norm


def reference_forward(features, gamma, beta, weight):
    x = features.astype(jnp.float32)
    mean = jnp.mean(x, axis=0, keepdims=True)
    var = jnp.mean((x - mean) ** 2, axis=0, keepdims=True)
    bn = (x - mean) / jnp.sqrt(var + 1e-5) * gamma + beta
    cls = bn @ weight.T
    norm = jnp.sqrt(jnp.sum(x * x, axis=1, keepdims=True))
    return cls, x / norm


if __name__ == "__main__":
    B, C, PID = 8, 1024, 16

    key = jax.random.PRNGKey(0)
    k_feat, k_w = jax.random.split(key)

    features = jax.random.normal(k_feat, (B, C), dtype=jnp.float32)

    # Deterministic parameter init mirroring the module's __init__:
    gamma = jnp.ones((C,), jnp.float32)                              # BN weight = 1
    beta = jnp.zeros((C,), jnp.float32)                              # BN bias   = 0
    weight = 0.001 * jax.random.normal(k_w, (PID, C), jnp.float32)   # Linear std=0.001

    ref_cls, ref_feat = reference_forward(features, gamma, beta, weight)

    # --- f32 weight path: bit-for-bit-ish check against the f32 reference ----
    prep_f32 = prepare_classifier_weight(weight, dtype=jnp.float32)
    cls_f32, feat_f32 = classifier2_forward(features, gamma, beta, prep_f32)
    jax.block_until_ready((cls_f32, feat_f32))
    assert cls_f32.shape == (B, PID) and feat_f32.shape == (B, C)
    assert jnp.allclose(cls_f32, ref_cls, atol=1e-4, rtol=1e-4)
    assert jnp.allclose(feat_f32, ref_feat, atol=1e-5, rtol=1e-5)

    # --- bf16 weight path (default for deployment: halves weight HBM traffic) --
    prep_bf16 = prepare_classifier_weight(weight)                    # dtype=bfloat16
    cls_bf16, feat_bf16 = classifier2_forward(features, gamma, beta, prep_bf16)
    jax.block_until_ready((cls_bf16, feat_bf16))
    assert cls_bf16.shape == (B, PID) and feat_bf16.shape == (B, C)
    # bf16 inputs / f32 accumulation: loosened tolerance vs the f32 reference.
    assert jnp.allclose(cls_bf16, ref_cls, atol=2e-3, rtol=3e-2)
    assert jnp.allclose(feat_bf16, ref_feat, atol=1e-5, rtol=1e-5)   # feat path is f32

    print("KERNEL_OK")
</pallas_src>

<mosaic_0001>
module attributes {stable_mosaic.version = 11 : i64} {
  func.func @bn_l2_kernel(%arg0: memref<8x1024xf32, #tpu.memory_space<vmem>>, %arg1: memref<1x1024xf32, #tpu.memory_space<vmem>>, %arg2: memref<1x1024xf32, #tpu.memory_space<vmem>>, %arg3: memref<8x1024xf32, #tpu.memory_space<vmem>>, %arg4: memref<8x1024xf32, #tpu.memory_space<vmem>>) attributes {dimension_semantics = [], scalar_prefetch = 0 : i64, scratch_operands = 0 : i64, tpu.core_type = #tpu.core_type<tc>} {
    %c0 = arith.constant 0 : index
    %c0_0 = arith.constant 0 : index
    %0 = vector.load %arg0[%c0, %c0_0] : memref<8x1024xf32, #tpu.memory_space<vmem>>, vector<8x1024xf32>
    %cst = arith.constant dense<0.000000e+00> : vector<1024xf32>
    %1 = vector.multi_reduction <add>, %0, %cst [0] : vector<8x1024xf32> to vector<1024xf32>
    %2 = vector.shape_cast %1 : vector<1024xf32> to vector<1x1024xf32>
    %cst_1 = arith.constant 8.000000e+00 : f32
    %3 = vector.broadcast %cst_1 : f32 to vector<1x1024xf32>
    %4 = arith.divf %2, %3 : vector<1x1024xf32>
    %5 = vector.broadcast %4 : vector<1x1024xf32> to vector<8x1024xf32>
    %6 = arith.subf %0, %5 : vector<8x1024xf32>
    %7 = arith.mulf %6, %6 : vector<8x1024xf32>
    %cst_2 = arith.constant dense<0.000000e+00> : vector<1024xf32>
    %8 = vector.multi_reduction <add>, %7, %cst_2 [0] : vector<8x1024xf32> to vector<1024xf32>
    %9 = vector.shape_cast %8 : vector<1024xf32> to vector<1x1024xf32>
    %cst_3 = arith.constant 8.000000e+00 : f32
    %10 = vector.broadcast %cst_3 : f32 to vector<1x1024xf32>
    %11 = arith.divf %9, %10 : vector<1x1024xf32>
    %cst_4 = arith.constant 9.99999974E-6 : f32
    %12 = vector.broadcast %cst_4 : f32 to vector<1x1024xf32>
    %13 = arith.addf %11, %12 : vector<1x1024xf32>
    %14 = math.rsqrt %13 : vector<1x1024xf32>
    %15 = vector.broadcast %14 : vector<1x1024xf32> to vector<8x1024xf32>
    %16 = arith.mulf %6, %15 : vector<8x1024xf32>
    %c0_5 = arith.constant 0 : index
    %c0_6 = arith.constant 0 : index
    %17 = vector.load %arg1[%c0_5, %c0_6] : memref<1x1024xf32, #tpu.memory_space<vmem>>, vector<1x1024xf32>
    %18 = vector.broadcast %17 : vector<1x1024xf32> to vector<8x1024xf32>
    %19 = arith.mulf %16, %18 : vector<8x1024xf32>
    %c0_7 = arith.constant 0 : index
    %c0_8 = arith.constant 0 : index
    %20 = vector.load %arg2[%c0_7, %c0_8] : memref<1x1024xf32, #tpu.memory_space<vmem>>, vector<1x1024xf32>
    %21 = vector.broadcast %20 : vector<1x1024xf32> to vector<8x1024xf32>
    %22 = arith.addf %19, %21 : vector<8x1024xf32>
    %c0_9 = arith.constant 0 : index
    %c0_10 = arith.constant 0 : index
    %23 = vector.load %arg3[%c0_9, %c0_10] : memref<8x1024xf32, #tpu.memory_space<vmem>>, vector<8x1024xf32>
    tpu.vector_store %arg3[%c0_9, %c0_10], %22 {strides = array<i32>} : memref<8x1024xf32, #tpu.memory_space<vmem>>, vector<8x1024xf32>,
    %24 = arith.mulf %0, %0 : vector<8x1024xf32>
    %cst_11 = arith.constant dense<0.000000e+00> : vector<8xf32>
    %25 = vector.multi_reduction <add>, %24, %cst_11 [1] : vector<8x1024xf32> to vector<8xf32>
    %26 = vector.shape_cast %25 : vector<8xf32> to vector<8x1xf32>
    %27 = math.rsqrt %26 : vector<8x1xf32>
    %28 = vector.broadcast %27 : vector<8x1xf32> to vector<8x1024xf32>
    %29 = arith.mulf %0, %28 : vector<8x1024xf32>
    %c0_12 = arith.constant 0 : index
    %c0_13 = arith.constant 0 : index
    %30 = vector.load %arg4[%c0_12, %c0_13] : memref<8x1024xf32, #tpu.memory_space<vmem>>, vector<8x1024xf32>
    tpu.vector_store %arg4[%c0_12, %c0_13], %29 {strides = array<i32>} : memref<8x1024xf32, #tpu.memory_space<vmem>>, vector<8x1024xf32>,
    return
  }
}

</mosaic_0001>

<llo_original>
// kernel: tpu_custom_call.1
$region0: #{tpu_custom_call.1}
  #allocation0 [shape = 'u32[]', space=smem, size = 0x4, offset = 0x4, fixed_abs, tag = 'smem constant byte address 0x4 - core index']
  #allocation1 [shape = 'u32[144,128]{1,0:T(1,128)}', space=vmem, size = 0x12000, scoped, tag = 'internal scratch']
  %s0 = inlined_call_operand.hbm [shape: f32[8,1024], index: 0, kind: input, shape index: {}]
  %s1 = inlined_call_operand.hbm [shape: f32[1,1024], index: 1, kind: input, shape index: {}]
  %s2 = inlined_call_operand.hbm [shape: f32[1,1024], index: 2, kind: input, shape index: {}]
  %s3 = inlined_call_operand.hbm [shape: f32[8,1024], index: 3, kind: output, shape index: {0}]
  %s4 = inlined_call_operand.hbm [shape: f32[8,1024], index: 4, kind: output, shape index: {1}]
  %5 = xla_tuple %s3, %s4
  %s6 = sld [smem:[#allocation0]]
  $region42: #{tpu_custom_call.1} parent=0
    _
  %s8 = ssub.s32 1, %s6
  %s9 = scalar_select 0, %s8, %s6
  $region1: #{tpu_custom_call.1} parent=0
    #allocation2 [shape = 'u8[32768]{0}', space=vmem, size = 0x8000, scoped, tag = 'input window, operand 0, single buffered']
    #allocation3 [shape = 's32[1]{0}', space=sflag, size = 0x4, scoped, tag = 'scoped memory for tpu_custom_call.1']
    #allocation4 [shape = 's32[1]{0}', space=sflag, size = 0x4, scoped, tag = 'scoped memory for tpu_custom_call.1']
    #allocation5 [shape = 'u8[4096]{0}', space=vmem, size = 0x1000, scoped, tag = 'input window, operand 1, single buffered']
    #allocation6 [shape = 's32[1]{0}', space=sflag, size = 0x4, scoped, tag = 'scoped memory for tpu_custom_call.1']
    #allocation7 [shape = 'u8[4096]{0}', space=vmem, size = 0x1000, scoped, tag = 'input window, operand 2, single buffered']
    #allocation8 [shape = 'u8[32768]{0}', space=vmem, size = 0x8000, scoped, tag = 'output window, operand 0, single buffered']
    #allocation9 [shape = 'u8[32768]{0}', space=vmem, size = 0x8000, scoped, tag = 'output window, operand 1, single buffered']
    #allocation10 [shape = 's32[1]{0}', space=sflag, size = 0x4, scoped, tag = 'scoped memory for tpu_custom_call.1']
    %10 = vsyncpa [#allocation3], 0
    %11 = vsyncpa [#allocation6], 0
    %12 = vsyncpa [#allocation4], 0
    %13 = vsyncpa [#allocation10], 0
    // Predicated region
    $region2: #{tpu_custom_call.1} parent=1 // pred_check
      _
    $region3: #{tpu_custom_call.1} parent=1 // pred_check_branch
      %15 = sbr.rel (0) target = $region5
    $region4: #{tpu_custom_call.1} parent=1 // pred_region
      %s17 = ssub.s32 1024, 1024
      %18 = vsyncadd [#allocation3], %s17
      %s20 = sshll.u32 [#allocation2], 4
      %s21 = int_to_ptr.vmem [resolvable:$true] %s20
      %23 = dma.hbm_to_vmem [thread:$0]  %s0, 1024, %s21, [#allocation3]
    $region5: #{tpu_custom_call.1} parent=1 // pred_fallthru
      _
    // Predicated region
    $region6: #{tpu_custom_call.1} parent=1 // pred_check
      _
    $region7: #{tpu_custom_call.1} parent=1 // pred_check_branch
      %25 = sbr.rel (0) target = $region9
    $region8: #{tpu_custom_call.1} parent=1 // pred_region
      %s27 = ssub.s32 128, 128
      %28 = vsyncadd [#allocation6], %s27
      %s30 = sshll.u32 [#allocation5], 4
      %s31 = int_to_ptr.vmem [resolvable:$true] %s30
      %33 = dma.hbm_to_vmem [thread:$0]  %s1, 128, %s31, [#allocation6]
    $region9: #{tpu_custom_call.1} parent=1 // pred_fallthru
      _
    // Predicated region
    $region10: #{tpu_custom_call.1} parent=1 // pred_check
      _
    $region11: #{tpu_custom_call.1} parent=1 // pred_check_branch
      %35 = sbr.rel (0) target = $region13
    $region12: #{tpu_custom_call.1} parent=1 // pred_region
      %s37 = ssub.s32 128, 128
      %38 = vsyncadd [#allocation6], %s37
      %s40 = sshll.u32 [#allocation7], 4
      %s41 = int_to_ptr.vmem [resolvable:$true] %s40
      %43 = dma.hbm_to_vmem [thread:$0]  %s2, 128, %s41, [#allocation6]
    $region13: #{tpu_custom_call.1} parent=1 // pred_fallthru
      _
    // Predicated region
    $region14: #{tpu_custom_call.1} parent=1 // pred_check
      _
    $region15: #{tpu_custom_call.1} parent=1 // pred_check_branch
      %45 = sbr.rel (0) target = $region17
    $region16: #{tpu_custom_call.1} parent=1 // pred_region
      %46 = dma.done [#allocation3], 1024
    $region17: #{tpu_custom_call.1} parent=1 // pred_fallthru
      _
    // Predicated region
    $region18: #{tpu_custom_call.1} parent=1 // pred_check
      _
    $region19: #{tpu_custom_call.1} parent=1 // pred_check_branch
      %48 = sbr.rel (0) target = $region21
    $region20: #{tpu_custom_call.1} parent=1 // pred_region
      %49 = dma.done [#allocation6], 128
    $region21: #{tpu_custom_call.1} parent=1 // pred_fallthru
      _
    // Predicated region
    $region22: #{tpu_custom_call.1} parent=1 // pred_check
      _
    $region23: #{tpu_custom_call.1} parent=1 // pred_check_branch
      %51 = sbr.rel (0) target = $region25
    $region24: #{tpu_custom_call.1} parent=1 // pred_region
      %52 = dma.done [#allocation6], 128
    $region25: #{tpu_custom_call.1} parent=1 // pred_fallthru
      _
    %v53 = vld [vmem:[#allocation2] sm:$0xff]
    %v54 = vld [vmem:[#allocation2 + $0x8] sm:$0xff]
    %v55 = vld [vmem:[#allocation2 + $0x10] sm:$0xff]
    %v56 = vld [vmem:[#allocation2 + $0x18] sm:$0xff]
    %v57 = vld [vmem:[#allocation2 + $0x20] sm:$0xff]
    %v58 = vld [vmem:[#allocation2 + $0x28] sm:$0xff]
    %v59 = vld [vmem:[#allocation2 + $0x30] sm:$0xff]
    %v60 = vld [vmem:[#allocation2 + $0x38] sm:$0xff]
    %v61 = vrot.slane %v53, 4
    %v62 = vadd.f32 %v53, %v61
    %v63 = vrot.slane %v62, 2
    %v64 = vadd.f32 %v62, %v63
    %v65 = vrot.slane %v64, 1
    %v66 = vadd.f32 %v64, %v65
    %v67 = vrot.slane %v54, 4
    %v68 = vadd.f32 %v54, %v67
    %v69 = vrot.slane %v68, 2
    %v70 = vadd.f32 %v68, %v69
    %v71 = vrot.slane %v70, 1
    %v72 = vadd.f32 %v70, %v71
    %v73 = vrot.slane %v55, 4
    %v74 = vadd.f32 %v55, %v73
    %v75 = vrot.slane %v74, 2
    %v76 = vadd.f32 %v74, %v75
    %v77 = vrot.slane %v76, 1
    %v78 = vadd.f32 %v76, %v77
    %v79 = vrot.slane %v56, 4
    %v80 = vadd.f32 %v56, %v79
    %v81 = vrot.slane %v80, 2
    %v82 = vadd.f32 %v80, %v81
    %v83 = vrot.slane %v82, 1
    %v84 = vadd.f32 %v82, %v83
    %v85 = vrot.slane %v57, 4
    %v86 = vadd.f32 %v57, %v85
    %v87 = vrot.slane %v86, 2
    %v88 = vadd.f32 %v86, %v87
    %v89 = vrot.slane %v88, 1
    %v90 = vadd.f32 %v88, %v89
    %v91 = vrot.slane %v58, 4
    %v92 = vadd.f32 %v58, %v91
    %v93 = vrot.slane %v92, 2
    %v94 = vadd.f32 %v92, %v93
    %v95 = vrot.slane %v94, 1
    %v96 = vadd.f32 %v94, %v95
    %v97 = vrot.slane %v59, 4
    %v98 = vadd.f32 %v59, %v97
    %v99 = vrot.slane %v98, 2
    %v100 = vadd.f32 %v98, %v99
    %v101 = vrot.slane %v100, 1
    %v102 = vadd.f32 %v100, %v101
    %v103 = vrot.slane %v60, 4
    %v104 = vadd.f32 %v60, %v103
    %v105 = vrot.slane %v104, 2
    %v106 = vadd.f32 %v104, %v105
    %v107 = vrot.slane %v106, 1
    %v108 = vadd.f32 %v106, %v107
    %v109 = vrcp.pop 8.0
    %v110 = vmul.f32 %v66, %v109
    %v111 = vmul.f32 %v72, %v109
    %v112 = vmul.f32 %v78, %v109
    %v113 = vmul.f32 %v84, %v109
    %v114 = vmul.f32 %v90, %v109
    %v115 = vmul.f32 %v96, %v109
    %v116 = vmul.f32 %v102, %v109
    %v117 = vmul.f32 %v108, %v109
    %v118 = vsub.f32 %v53, %v110
    %v119 = vsub.f32 %v54, %v111
    %v120 = vsub.f32 %v55, %v112
    %v121 = vsub.f32 %v56, %v113
    %v122 = vsub.f32 %v57, %v114
    %v123 = vsub.f32 %v58, %v115
    %v124 = vsub.f32 %v59, %v116
    %v125 = vsub.f32 %v60, %v117
    %v126 = vmul.f32 %v118, %v118
    %v127 = vmul.f32 %v119, %v119
    %v128 = vmul.f32 %v120, %v120
    %v129 = vmul.f32 %v121, %v121
    %v130 = vmul.f32 %v122, %v122
    %v131 = vmul.f32 %v123, %v123
    %v132 = vmul.f32 %v124, %v124
    %v133 = vmul.f32 %v125, %v125
    %v134 = vrot.slane %v126, 4
    %v135 = vadd.f32 %v126, %v134
    %v136 = vrot.slane %v135, 2
    %v137 = vadd.f32 %v135, %v136
    %v138 = vrot.slane %v137, 1
    %v139 = vadd.f32 %v137, %v138
    %v140 = vrot.slane %v127, 4
    %v141 = vadd.f32 %v127, %v140
    %v142 = vrot.slane %v141, 2
    %v143 = vadd.f32 %v141, %v142
    %v144 = vrot.slane %v143, 1
    %v145 = vadd.f32 %v143, %v144
    %v146 = vrot.slane %v128, 4
    %v147 = vadd.f32 %v128, %v146
    %v148 = vrot.slane %v147, 2
    %v149 = vadd.f32 %v147, %v148
    %v150 = vrot.slane %v149, 1
    %v151 = vadd.f32 %v149, %v150
    %v152 = vrot.slane %v129, 4
    %v153 = vadd.f32 %v129, %v152
    %v154 = vrot.slane %v153, 2
    %v155 = vadd.f32 %v153, %v154
    %v156 = vrot.slane %v155, 1
    %v157 = vadd.f32 %v155, %v156
    %v158 = vrot.slane %v130, 4
    %v159 = vadd.f32 %v130, %v158
    %v160 = vrot.slane %v159, 2
    %v161 = vadd.f32 %v159, %v160
    %v162 = vrot.slane %v161, 1
    %v163 = vadd.f32 %v161, %v162
    %v164 = vrot.slane %v131, 4
    %v165 = vadd.f32 %v131, %v164
    %v166 = vrot.slane %v165, 2
    %v167 = vadd.f32 %v165, %v166
    %v168 = vrot.slane %v167, 1
    %v169 = vadd.f32 %v167, %v168
    %v170 = vrot.slane %v132, 4
    %v171 = vadd.f32 %v132, %v170
    %v172 = vrot.slane %v171, 2
    %v173 = vadd.f32 %v171, %v172
    %v174 = vrot.slane %v173, 1
    %v175 = vadd.f32 %v173, %v174
    %v176 = vrot.slane %v133, 4
    %v177 = vadd.f32 %v133, %v176
    %v178 = vrot.slane %v177, 2
    %v179 = vadd.f32 %v177, %v178
    %v180 = vrot.slane %v179, 1
    %v181 = vadd.f32 %v179, %v180
    %v182 = vmul.f32 %v139, %v109
    %v183 = vmul.f32 %v145, %v109
    %v184 = vmul.f32 %v151, %v109
    %v185 = vmul.f32 %v157, %v109
    %v186 = vmul.f32 %v163, %v109
    %v187 = vmul.f32 %v169, %v109
    %v188 = vmul.f32 %v175, %v109
    %v189 = vmul.f32 %v181, %v109
    %v190 = vadd.f32 %v182, 1e-05
    %v191 = vadd.f32 %v183, 1e-05
    %v192 = vadd.f32 %v184, 1e-05
    %v193 = vadd.f32 %v185, 1e-05
    %v194 = vadd.f32 %v186, 1e-05
    %v195 = vadd.f32 %v187, 1e-05
    %v196 = vadd.f32 %v188, 1e-05
    %v197 = vadd.f32 %v189, 1e-05
    %v198 = vrsqrt.pop %v190
    %v199 = vrsqrt.pop %v191
    %v200 = vrsqrt.pop %v192
    %v201 = vrsqrt.pop %v193
    %v202 = vrsqrt.pop %v194
    %v203 = vrsqrt.pop %v195
    %v204 = vrsqrt.pop %v196
    %v205 = vrsqrt.pop %v197
    %v206 = vmul.f32 %v118, %v198
    %v207 = vmul.f32 %v119, %v199
    %v208 = vmul.f32 %v120, %v200
    %v209 = vmul.f32 %v121, %v201
    %v210 = vmul.f32 %v122, %v202
    %v211 = vmul.f32 %v123, %v203
    %v212 = vmul.f32 %v124, %v204
    %v213 = vmul.f32 %v125, %v205
    %v214 = vld [vmem:[#allocation5] sm:$0xff]
    %v216 = vlaneseq
    %v217 = vshrl.u32 %v216, 7
    %v218 = vsub.s32 0, %v217
    %v219 = vrot.slane %v214, %v218
    %v220 = vlaneseq
    %v221 = vshrl.u32 %v220, 7
    %v222 = vsub.s32 1, %v221
    %v223 = vrot.slane %v214, %v222
    %v224 = vlaneseq
    %v225 = vshrl.u32 %v224, 7
    %v226 = vsub.s32 2, %v225
    %v227 = vrot.slane %v214, %v226
    %v228 = vlaneseq
    %v229 = vshrl.u32 %v228, 7
    %v230 = vsub.s32 3, %v229
    %v231 = vrot.slane %v214, %v230
    %v232 = vlaneseq
    %v233 = vshrl.u32 %v232, 7
    %v234 = vsub.s32 4, %v233
    %v235 = vrot.slane %v214, %v234
    %v236 = vlaneseq
    %v237 = vshrl.u32 %v236, 7
    %v238 = vsub.s32 5, %v237
    %v239 = vrot.slane %v214, %v238
    %v240 = vlaneseq
    %v241 = vshrl.u32 %v240, 7
    %v242 = vsub.s32 6, %v241
    %v243 = vrot.slane %v214, %v242
    %v244 = vlaneseq
    %v245 = vshrl.u32 %v244, 7
    %v246 = vsub.s32 7, %v245
    %v247 = vrot.slane %v214, %v246
    %v256 = vmul.f32 %v206, %v219
    %v257 = vmul.f32 %v207, %v223
    %v258 = vmul.f32 %v208, %v227
    %v259 = vmul.f32 %v209, %v231
    %v260 = vmul.f32 %v210, %v235
    %v261 = vmul.f32 %v211, %v239
    %v262 = vmul.f32 %v212, %v243
    %v263 = vmul.f32 %v213, %v247
    %v264 = vld [vmem:[#allocation7] sm:$0xff]
    %v266 = vlaneseq
    %v267 = vshrl.u32 %v266, 7
    %v268 = vsub.s32 0, %v267
    %v269 = vrot.slane %v264, %v268
    %v270 = vlaneseq
    %v271 = vshrl.u32 %v270, 7
    %v272 = vsub.s32 1, %v271
    %v273 = vrot.slane %v264, %v272
    %v274 = vlaneseq
    %v275 = vshrl.u32 %v274, 7
    %v276 = vsub.s32 2, %v275
    %v277 = vrot.slane %v264, %v276
    %v278 = vlaneseq
    %v279 = vshrl.u32 %v278, 7
    %v280 = vsub.s32 3, %v279
    %v281 = vrot.slane %v264, %v280
    %v282 = vlaneseq
    %v283 = vshrl.u32 %v282, 7
    %v284 = vsub.s32 4, %v283
    %v285 = vrot.slane %v264, %v284
    %v286 = vlaneseq
    %v287 = vshrl.u32 %v286, 7
    %v288 = vsub.s32 5, %v287
    %v289 = vrot.slane %v264, %v288
    %v290 = vlaneseq
    %v291 = vshrl.u32 %v290, 7
    %v292 = vsub.s32 6, %v291
    %v293 = vrot.slane %v264, %v292
    %v294 = vlaneseq
    %v295 = vshrl.u32 %v294, 7
    %v296 = vsub.s32 7, %v295
    %v297 = vrot.slane %v264, %v296
    %v306 = vadd.f32 %v256, %v269
    %v307 = vadd.f32 %v257, %v273
    %v308 = vadd.f32 %v258, %v277
    %v309 = vadd.f32 %v259, %v281
    %v310 = vadd.f32 %v260, %v285
    %v311 = vadd.f32 %v261, %v289
    %v312 = vadd.f32 %v262, %v293
    %v313 = vadd.f32 %v263, %v297
    %314 = vst [vmem:[#allocation8] sm:$0xff] %v306
    %315 = vst [vmem:[#allocation8 + $0x8] sm:$0xff] %v307
    %316 = vst [vmem:[#allocation8 + $0x10] sm:$0xff] %v308
    %317 = vst [vmem:[#allocation8 + $0x18] sm:$0xff] %v309
    %318 = vst [vmem:[#allocation8 + $0x20] sm:$0xff] %v310
    %319 = vst [vmem:[#allocation8 + $0x28] sm:$0xff] %v311
    %320 = vst [vmem:[#allocation8 + $0x30] sm:$0xff] %v312
    %321 = vst [vmem:[#allocation8 + $0x38] sm:$0xff] %v313
    %v322 = vmul.f32 %v53, %v53
    %v323 = vmul.f32 %v54, %v54
    %v324 = vmul.f32 %v55, %v55
    %v325 = vmul.f32 %v56, %v56
    %v326 = vmul.f32 %v57, %v57
    %v327 = vmul.f32 %v58, %v58
    %v328 = vmul.f32 %v59, %v59
    %v329 = vmul.f32 %v60, %v60
    %v330 = vadd.f32 %v322, %v323
    %v331 = vadd.f32 %v330, %v324
    %v332 = vadd.f32 %v331, %v325
    %v333 = vadd.f32 %v332, %v326
    %v334 = vadd.f32 %v333, %v327
    %v335 = vadd.f32 %v334, %v328
    %v336 = vadd.f32 %v335, %v329
    %337 = vadd.xlane.f32.xlu0 %v336
    %v338 = vpop.xlane.xlu0 %337
    %v339 = vrsqrt.pop %v338
    %v340 = vmul.f32 %v53, %v339
    %v341 = vmul.f32 %v54, %v339
    %v342 = vmul.f32 %v55, %v339
    %v343 = vmul.f32 %v56, %v339
    %v344 = vmul.f32 %v57, %v339
    %v345 = vmul.f32 %v58, %v339
    %v346 = vmul.f32 %v59, %v339
    %v347 = vmul.f32 %v60, %v339
    %348 = vst [vmem:[#allocation9] sm:$0xff] %v340
    %349 = vst [vmem:[#allocation9 + $0x8] sm:$0xff] %v341
    %350 = vst [vmem:[#allocation9 + $0x10] sm:$0xff] %v342
    %351 = vst [vmem:[#allocation9 + $0x18] sm:$0xff] %v343
    %352 = vst [vmem:[#allocation9 + $0x20] sm:$0xff] %v344
    %353 = vst [vmem:[#allocation9 + $0x28] sm:$0xff] %v345
    %354 = vst [vmem:[#allocation9 + $0x30] sm:$0xff] %v346
    %355 = vst [vmem:[#allocation9 + $0x38] sm:$0xff] %v347
    // Predicated region
    $region26: #{tpu_custom_call.1} parent=1 // pred_check
      _
    $region27: #{tpu_custom_call.1} parent=1 // pred_check_branch
      %357 = sbr.rel (0) target = $region29
    $region28: #{tpu_custom_call.1} parent=1 // pred_region
      %s359 = ssub.s32 1024, 1024
      %360 = vsyncadd [#allocation4], %s359
      %s362 = sshll.u32 [#allocation8], 4
      %s363 = int_to_ptr.vmem [resolvable:$true] %s362
      %365 = dma.vmem_to_hbm [thread:$0]  %s363, 1024, %s3, [#allocation4]
    $region29: #{tpu_custom_call.1} parent=1 // pred_fallthru
      _
    // Predicated region
    $region30: #{tpu_custom_call.1} parent=1 // pred_check
      _
    $region31: #{tpu_custom_call.1} parent=1 // pred_check_branch
      %367 = sbr.rel (0) target = $region33
    $region32: #{tpu_custom_call.1} parent=1 // pred_region
      %s369 = ssub.s32 1024, 1024
      %370 = vsyncadd [#allocation10], %s369
      %s372 = sshll.u32 [#allocation9], 4
      %s373 = int_to_ptr.vmem [resolvable:$true] %s372
      %375 = dma.vmem_to_hbm [thread:$0]  %s373, 1024, %s4, [#allocation10]
    $region33: #{tpu_custom_call.1} parent=1 // pred_fallthru
      _
    // Predicated region
    $region34: #{tpu_custom_call.1} parent=1 // pred_check
      _
    $region35: #{tpu_custom_call.1} parent=1 // pred_check_branch
      %377 = sbr.rel (0) target = $region37
    $region36: #{tpu_custom_call.1} parent=1 // pred_region
      %378 = dma.done [#allocation4], 1024
    $region37: #{tpu_custom_call.1} parent=1 // pred_fallthru
      _
    // Predicated region
    $region38: #{tpu_custom_call.1} parent=1 // pred_check
      _
    $region39: #{tpu_custom_call.1} parent=1 // pred_check_branch
      %380 = sbr.rel (0) target = $region41
    $region40: #{tpu_custom_call.1} parent=1 // pred_region
      %381 = dma.done [#allocation10], 1024
    $region41: #{tpu_custom_call.1} parent=1 // pred_fallthru
      _
    %382 = vsyncpa [#allocation3], 1
    %383 = vsyncpa [#allocation6], 1
    %384 = vsyncpa [#allocation4], 1
    %385 = vsyncpa [#allocation10], 1

</llo_original>
